<compile_context>
chip_gen: v7x
topology: tpu7x:2x2x1
jax: 0.10.0
libtpu: 0.0.40
codegen_flags: <defaults>
</compile_context>

<pallas_src>
import math
import jax
import jax.numpy as jnp
from jax.experimental import pallas as pl
from jax.experimental.pallas import tpu as pltpu

LANE = 128


def _round_up(x, m):
    return ((x + m - 1) // m) * m


def _support_kernel(x_ref, w_ref, sup_ref):
    # support = x @ W  (f32 accumulate on the MXU, stored bf16 to halve the HBM
    # stream feeding the aggregation kernel).
    sup_ref[...] = jnp.dot(
        x_ref[...], w_ref[...], preferred_element_type=jnp.float32
    ).astype(sup_ref.dtype)


def _aggregate_kernel(adj_ref, sup_ref, b_ref, out_ref, acc_ref):
    # out_tile = (sum_k adj[i, k] @ support[k]) + bias
    k = pl.program_id(1)

    @pl.when(k == 0)
    def _():
        acc_ref[...] = jnp.zeros_like(acc_ref)

    acc_ref[...] += jnp.dot(
        adj_ref[...], sup_ref[...], preferred_element_type=jnp.float32
    )

    @pl.when(k == pl.num_programs(1) - 1)
    def _():
        out_ref[...] = acc_ref[...] + b_ref[...]


def graph_convolution(x, adj, weight, bias, *, tile_m=256, tile_k=512):
    """GCN forward: adj @ (x @ weight) + bias."""
    N, f_in = x.shape
    f_out = weight.shape[1]
    assert adj.shape == (N, N)

    x = x.astype(jnp.float32)
    weight = weight.astype(jnp.float32)
    bias = bias.astype(jnp.float32)

    # ---- padding: lane-dense F_out, tile-divisible N ------------------------
    f_out_p = _round_up(f_out, LANE)
    tm = min(tile_m, _round_up(N, LANE))
    tk = min(tile_k, _round_up(N, LANE))
    assert max(tm, tk) % min(tm, tk) == 0
    n_p = _round_up(N, max(tm, tk))

    x_p = jnp.zeros((n_p, f_in), jnp.float32).at[:N, :].set(x)
    w_p = jnp.zeros((f_in, f_out_p), jnp.float32).at[:, :f_out].set(weight)
    b_p = jnp.zeros((1, f_out_p), jnp.float32).at[0, :f_out].set(bias)
    # bf16 adjacency (cast first, then zero-pad): the aggregation is
    # HBM-bandwidth bound on this stream.
    adj_p = (
        jnp.zeros((n_p, n_p), jnp.bfloat16)
        .at[:N, :N]
        .set(adj.astype(jnp.bfloat16))
    )

    # ---- kernel 1: support = x @ W (row-parallel) ---------------------------
    support = pl.pallas_call(
        _support_kernel,
        out_shape=jax.ShapeDtypeStruct((n_p, f_out_p), jnp.bfloat16),
        grid_spec=pltpu.PrefetchScalarGridSpec(
            num_scalar_prefetch=0,
            grid=(n_p // tm,),
            in_specs=[
                pl.BlockSpec((tm, f_in), lambda i: (i, 0)),       # x row tile
                pl.BlockSpec((f_in, f_out_p), lambda i: (0, 0)),  # W (full, tiny)
            ],
            out_specs=pl.BlockSpec((tm, f_out_p), lambda i: (i, 0)),
        ),
        compiler_params=pltpu.CompilerParams(
            dimension_semantics=("parallel",),
        ),
        cost_estimate=pl.CostEstimate(
            flops=2 * n_p * f_in * f_out_p,
            transcendentals=0,
            bytes_accessed=(n_p * f_in + f_in * f_out_p) * 4 + n_p * f_out_p * 2,
        ),
    )(x_p, w_p)

    # ---- kernel 2: out = adj @ support + bias (row-parallel, K-tiled) -------
    out_p = pl.pallas_call(
        _aggregate_kernel,
        out_shape=jax.ShapeDtypeStruct((n_p, f_out_p), jnp.float32),
        grid_spec=pltpu.PrefetchScalarGridSpec(
            num_scalar_prefetch=0,
            grid=(n_p // tm, n_p // tk),
            in_specs=[
                pl.BlockSpec((tm, tk), lambda i, k: (i, k)),       # adj tile (bf16)
                pl.BlockSpec((tk, f_out_p), lambda i, k: (k, 0)),  # support strip
                pl.BlockSpec((1, f_out_p), lambda i, k: (0, 0)),   # bias
            ],
            out_specs=pl.BlockSpec((tm, f_out_p), lambda i, k: (i, 0)),
            scratch_shapes=[pltpu.VMEM((tm, f_out_p), jnp.float32)],
        ),
        compiler_params=pltpu.CompilerParams(
            dimension_semantics=("parallel", "arbitrary"),
            vmem_limit_bytes=48 * 1024 * 1024,
        ),
        cost_estimate=pl.CostEstimate(
            flops=2 * n_p * n_p * f_out_p,
            transcendentals=0,
            bytes_accessed=(
                n_p * n_p * 2                        # adj (bf16)
                + (n_p // tm) * n_p * f_out_p * 2    # support strips (bf16)
                + f_out_p * 4                        # bias
                + n_p * f_out_p * 4                  # out (f32)
            ),
        ),
    )(adj_p, support, b_p)

    # Slice away N / F_out padding.
    return out_p[:N, :f_out]


if __name__ == "__main__":
    # Small, shape-consistent synthetic problem.
    N, F_IN, F_OUT = 512, 64, 32

    key = jax.random.PRNGKey(0)
    k_x, k_adj, k_w, k_b = jax.random.split(key, 4)

    # Inputs (the PyTorch script casts features/adj to float64; f32 here).
    x = jax.random.normal(k_x, (N, F_IN), dtype=jnp.float32)

    # Symmetric, row-normalized adjacency (dense stand-in for torch.spmm's sparse adj).
    a = (jax.random.uniform(k_adj, (N, N)) < 0.1).astype(jnp.float32)
    a = jnp.maximum(a, a.T) + jnp.eye(N, dtype=jnp.float32)
    adj = a / jnp.sum(a, axis=1, keepdims=True)

    # Parameters: uniform(-stdv, stdv), stdv = 1/sqrt(out_features) — matches reset_parameters().
    stdv = 1.0 / math.sqrt(F_OUT)
    weight = jax.random.uniform(k_w, (F_IN, F_OUT), minval=-stdv, maxval=stdv,
                                dtype=jnp.float32)
    bias = jax.random.uniform(k_b, (F_OUT,), minval=-stdv, maxval=stdv,
                              dtype=jnp.float32)

    out = graph_convolution(x, adj, weight, bias)
    out = jax.block_until_ready(out)

    # Pure-JAX f32 reference check (loosened tolerance for the bf16 adj/support streams).
    ref = adj @ (x @ weight) + bias[None, :]
    assert out.shape == (N, F_OUT)
    assert jnp.allclose(out, ref, atol=2e-2, rtol=2e-2), "mismatch vs reference"

    print("KERNEL_OK")
</pallas_src>

<mosaic_0001>
module attributes {stable_mosaic.version = 11 : i64} {
  func.func @_support_kernel(%arg0: i32, %arg1: memref<256x64xf32, #tpu.memory_space<vmem>>, %arg2: memref<64x128xf32, #tpu.memory_space<vmem>>, %arg3: memref<256x128xbf16, #tpu.memory_space<vmem>>) attributes {dimension_semantics = [#tpu.dimension_semantics<parallel>], iteration_bounds = array<i64: 2>, scalar_prefetch = 0 : i64, scratch_operands = 0 : i64, tpu.core_type = #tpu.core_type<tc>, window_params = [{transform_indices = @transform_0, window_bounds = array<i64: 256, 64>}, {pipeline_mode = #tpu.pipeline_mode<synchronous>, transform_indices = @transform_1, window_bounds = array<i64: 64, 128>}, {transform_indices = @transform_2, window_bounds = array<i64: 256, 128>}]} {
    %c0 = arith.constant 0 : index
    %c0_0 = arith.constant 0 : index
    %0 = vector.load %arg1[%c0, %c0_0] : memref<256x64xf32, #tpu.memory_space<vmem>>, vector<256x64xf32>
    %c0_1 = arith.constant 0 : index
    %c0_2 = arith.constant 0 : index
    %1 = vector.load %arg2[%c0_1, %c0_2] : memref<64x128xf32, #tpu.memory_space<vmem>>, vector<64x128xf32>
    %cst = arith.constant dense<0.000000e+00> : vector<256x128xf32>
    %2 = tpu.matmul %0, %1, %cst {dimension_numbers = #tpu.dot_dimension_numbers<[1], [0], [0], [1], [0, 0, 1, 1], [], []>} : vector<256x64xf32>, vector<64x128xf32>, vector<256x128xf32> -> vector<256x128xf32>
    %3 = arith.truncf %2 : vector<256x128xf32> to vector<256x128xbf16>
    %c0_3 = arith.constant 0 : index
    %c0_4 = arith.constant 0 : index
    %4 = vector.load %arg3[%c0_3, %c0_4] : memref<256x128xbf16, #tpu.memory_space<vmem>>, vector<256x128xbf16>
    tpu.vector_store %arg3[%c0_3, %c0_4], %3 {strides = array<i32>} : memref<256x128xbf16, #tpu.memory_space<vmem>>, vector<256x128xbf16>,
    return
  }
  func.func @transform_0(%arg0: i32) -> (i32, i32) {
    %c0_i32 = arith.constant 0 : i32
    %c0_i32_0 = arith.constant 0 : i32
    return %arg0, %c0_i32 : i32, i32
  }
  func.func @transform_1(%arg0: i32) -> (i32, i32) {
    %c0_i32 = arith.constant 0 : i32
    %c0_i32_0 = arith.constant 0 : i32
    %c0_i32_1 = arith.constant 0 : i32
    return %c0_i32, %c0_i32_0 : i32, i32
  }
  func.func @transform_2(%arg0: i32) -> (i32, i32) {
    %c0_i32 = arith.constant 0 : i32
    %c0_i32_0 = arith.constant 0 : i32
    return %arg0, %c0_i32 : i32, i32
  }
}

</mosaic_0001>

<llo_original>
// kernel: tpu_custom_call.1
$region0: #{tpu_custom_call.1}
  #allocation0 [shape = 'u32[]', space=smem, size = 0x4, offset = 0x4, fixed_abs, tag = 'smem constant byte address 0x4 - core index']
  #allocation1 [shape = 'u32[144,128]{1,0:T(1,128)}', space=vmem, size = 0x12000, scoped, tag = 'internal scratch']
  %s0 = inlined_call_operand.vmem [shape: f32[512,64], index: 0, kind: input, shape index: {}]
  %s1 = inlined_call_operand.vmem [shape: f32[64,128], index: 1, kind: input, shape index: {}]
  %s2 = inlined_call_operand.hbm [shape: bf16[512,128], index: 2, kind: output, shape index: {}]
  %s3 = sld [smem:[#allocation0]]
  $region41: #{tpu_custom_call.1} parent=0
    _
  %s5 = ssub.s32 1, %s3
  %s6 = scalar_select 0, %s5, %s3
  $region1: #{tpu_custom_call.1} parent=0
    #allocation2 [shape = 'u8[131072]{0}', space=vmem, size = 0x20000, scoped, tag = 'output window, operand 0']
    #allocation3 [shape = 's32[2]{0}', space=sflag, size = 0x8, scoped, tag = 'scoped memory for tpu_custom_call.1']
    %7 = vsyncpa [#allocation3], 0
    %s8 = scalar_lea.sflag [#allocation3], 1
    %9 = vsyncpa %s8, 0
    loop: start=0, step=1, limit=4
    $region2: #{tpu_custom_call.1} parent=1 // loop_pre_header
      _
    $region3: #{tpu_custom_call.1} parent=1 // loop_header
      %s11 = sphi 0, %s15
      %p12 = scmp.ge.s32.totalorder %s11, 4
      %s21 = sphi 0, %s23
      %s24 = sphi 0, %s21
      %s25 = sphi 0, %s24
      %s41 = sphi 0, %s25
      %s45 = sphi 0, %s45
      %s47 = sphi 0, %s45
      %s48 = sphi 0, %s47
      %s62 = sphi 0, %s48
      %s68 = sphi 0, %s70
      %s71 = sphi 0, %s68
      %s72 = sphi 0, %s71
      %s88 = sphi 0, %s72
    $region4: #{tpu_custom_call.1} parent=1 // loop_header_branch
      %14 = sbr.rel (%p12) target = $region8
    $region5: #{tpu_custom_call.1} parent=1 // loop_body
      %s16 = ssub.s32 %s11, 1
      %s17 = ssub.s32 %s11, 2
      %s18 = sadd.s32 %s11, 1
      %s19 = ssub.s32 %s11, %s18
      %p20 = scmp.eq.s32.totalorder %s19, 0
      %s22 = sadd.s32 %s21, 1
      %s23 = scalar_select %p20, %s21, %s22
      %p26 = pneg %p20
      %p27 = scmp.eq.s32.totalorder %s11, 1
      %p28 = por %p26, %p27
      %p29 = scmp.ne.s32.totalorder %s21, %s24
      %p30 = scmp.eq.s32.totalorder %s11, 0
      %p31 = por %p29, %p30
      %p32 = scmp.ne.s32.totalorder %s21, %s24
      %p33 = scmp.eq.s32.totalorder %s16, 1
      %p34 = por %p32, %p33
      %p35 = scmp.ne.s32.totalorder %s24, %s25
      %p36 = scmp.eq.s32.totalorder %s16, 0
      %p37 = por %p35, %p36
      %p38 = scmp.ne.s32.totalorder %s24, %s25
      %p39 = scmp.eq.s32.totalorder %s17, 1
      %p40 = por %p38, %p39
      %p42 = scmp.ne.s32.totalorder %s25, %s41
      %p43 = scmp.eq.s32.totalorder %s17, 0
      %p44 = por %p42, %p43
      %s46 = sadd.s32 %s45, 1
      %p49 = scmp.eq.s32.totalorder %s11, 1
      %p50 = scmp.ne.s32.totalorder %s45, %s47
      %p51 = scmp.eq.s32.totalorder %s11, 0
      %p52 = por %p50, %p51
      %p53 = scmp.ne.s32.totalorder %s45, %s47
      %p54 = scmp.eq.s32.totalorder %s16, 1
      %p55 = por %p53, %p54
      %p56 = scmp.ne.s32.totalorder %s47, %s48
      %p57 = scmp.eq.s32.totalorder %s16, 0
      %p58 = por %p56, %p57
      %p59 = scmp.ne.s32.totalorder %s47, %s48
      %p60 = scmp.eq.s32.totalorder %s17, 1
      %p61 = por %p59, %p60
      %p63 = scmp.ne.s32.totalorder %s48, %s62
      %p64 = scmp.eq.s32.totalorder %s17, 0
      %p65 = por %p63, %p64
      %s66 = ssub.s32 %s11, %s18
      %p67 = scmp.eq.s32.totalorder %s66, 0
      %s69 = sadd.s32 %s68, 1
      %s70 = scalar_select %p67, %s68, %s69
      %p73 = pneg %p67
      %p74 = scmp.eq.s32.totalorder %s11, 1
      %p75 = por %p73, %p74
      %p76 = scmp.ne.s32.totalorder %s68, %s71
      %p77 = scmp.eq.s32.totalorder %s11, 0
      %p78 = por %p76, %p77
      %p79 = scmp.ne.s32.totalorder %s68, %s71
      %p80 = scmp.eq.s32.totalorder %s16, 1
      %p81 = por %p79, %p80
      %p82 = scmp.ne.s32.totalorder %s71, %s72
      %p83 = scmp.eq.s32.totalorder %s16, 0
      %p84 = por %p82, %p83
      %p85 = scmp.ne.s32.totalorder %s71, %s72
      %p86 = scmp.eq.s32.totalorder %s17, 1
      %p87 = por %p85, %p86
      %p89 = scmp.ne.s32.totalorder %s72, %s88
      %p90 = scmp.eq.s32.totalorder %s17, 0
      %p91 = por %p89, %p90
      %p92 = scmp.le.s32.totalorder 1, %s11
      %p93 = scmp.lt.s32.totalorder %s11, 3
      %p94 = pnand %p92, %p93
      %p95 = pneg %p94
      // Predicated region
      $region9: #{tpu_custom_call.1} parent=5 // pred_check
        _
      $region10: #{tpu_custom_call.1} parent=5 // pred_check_branch
        %97 = sbr.rel (%p94) target = $region12
      $region11: #{tpu_custom_call.1} parent=5 // pred_region
        %s98 = ssub.s32 %s11, 1
        // Predicated region
        $region13: #{tpu_custom_call.1} parent=11 // pred_check
          %p99 = pneg %p58
        $region14: #{tpu_custom_call.1} parent=11 // pred_check_branch
          %101 = sbr.rel (%p99) target = $region16
        $region15: #{tpu_custom_call.1} parent=11 // pred_region
          _
        $region16: #{tpu_custom_call.1} parent=11 // pred_fallthru
          _
      $region12: #{tpu_custom_call.1} parent=5 // pred_fallthru
        _
      %p102 = scmp.lt.s32.totalorder %s11, 2
      // Predicated region
      $region17: #{tpu_custom_call.1} parent=5 // pred_check
        %p103 = pneg %p102
      $region18: #{tpu_custom_call.1} parent=5 // pred_check_branch
        %105 = sbr.rel (%p103) target = $region20
      $region19: #{tpu_custom_call.1} parent=5 // pred_region
        // Predicated region
        $region21: #{tpu_custom_call.1} parent=19 // pred_check
          %p106 = pneg %p31
        $region22: #{tpu_custom_call.1} parent=19 // pred_check_branch
          %108 = sbr.rel (%p106) target = $region24
        $region23: #{tpu_custom_call.1} parent=19 // pred_region
          %s109 = smul.u32 32, %s11
          %p110 = scmp.lt.s32.totalorder %s109, 63
          %s111 = scalar_select %p110, %s109, 63
          %s112 = smul.addr %s111, 8
          %s113 = scalar_lea.vmem %s0, %s112
          %s114 = smul.u32 32, %s11
        $region24: #{tpu_custom_call.1} parent=19 // pred_fallthru
          _
      $region20: #{tpu_custom_call.1} parent=5 // pred_fallthru
        _
      %p115 = scmp.le.s32.totalorder 1, %s11
      %p116 = scmp.lt.s32.totalorder %s11, 3
      %p117 = pnand %p115, %p116
      %p118 = pneg %p117
      // Predicated region
      $region25: #{tpu_custom_call.1} parent=5 // pred_check
        _
      $region26: #{tpu_custom_call.1} parent=5 // pred_check_branch
        %120 = sbr.rel (%p117) target = $region28
      $region27: #{tpu_custom_call.1} parent=5 // pred_region
        %s121 = ssub.s32 %s11, 1
        %s122 = smul.u32 32, %s16
        %p123 = scmp.lt.s32.totalorder %s122, 63
        %s124 = scalar_select %p123, %s122, 63
        %s125 = smul.addr %s124, 8
        %s126 = scalar_lea.vmem %s0, %s125
        %p127 = pneg %p37
        %p128 = pneg %p34
        %p129 = pneg %p58
        %p130 = pneg %p55
        %p131 = pneg %p84
        %p132 = pneg %p81
        %s133 = sand.u32 %s71, 1
        %s134 = scalar_lea.sflag [#allocation3], %s133
        %s135 = sand.u32 %s71, 1
        %s136 = smul.addr %s135, 128
        %s137 = scalar_lea.vmem [#allocation2], %s136
        %s138 = smul.u32 32, %s16
        %p139 = scmp.lt.s32.totalorder %s138, 63
        %s140 = scalar_select %p139, %s138, 63
        %s141 = smul.addr %s140, 8
        %s142 = scalar_lea.vmem %s0, %s141
        %s143 = smul.u32 32, %s16
        %s144 = smul.u32 32, %s16
        %v145 = vld [vmem:[%s142] sm:$0xff]
        %v146 = vld [vmem:[%s142 + $0x8] sm:$0xff]
        %v147 = vld [vmem:[%s142 + $0x10] sm:$0xff]
        %v148 = vld [vmem:[%s142 + $0x18] sm:$0xff]
        %v149 = vld [vmem:[%s142 + $0x20] sm:$0xff]
        %v150 = vld [vmem:[%s142 + $0x28] sm:$0xff]
        %v151 = vld [vmem:[%s142 + $0x30] sm:$0xff]
        %v152 = vld [vmem:[%s142 + $0x38] sm:$0xff]
        %v153 = vld [vmem:[%s142 + $0x40] sm:$0xff]
        %v154 = vld [vmem:[%s142 + $0x48] sm:$0xff]
        %v155 = vld [vmem:[%s142 + $0x50] sm:$0xff]
        %v156 = vld [vmem:[%s142 + $0x58] sm:$0xff]
        %v157 = vld [vmem:[%s142 + $0x60] sm:$0xff]
        %v158 = vld [vmem:[%s142 + $0x68] sm:$0xff]
        %v159 = vld [vmem:[%s142 + $0x70] sm:$0xff]
        %v160 = vld [vmem:[%s142 + $0x78] sm:$0xff]
        %v161 = vld [vmem:[%s142 + $0x80] sm:$0xff]
        %v162 = vld [vmem:[%s142 + $0x88] sm:$0xff]
        %v163 = vld [vmem:[%s142 + $0x90] sm:$0xff]
        %v164 = vld [vmem:[%s142 + $0x98] sm:$0xff]
        %v165 = vld [vmem:[%s142 + $0xa0] sm:$0xff]
        %v166 = vld [vmem:[%s142 + $0xa8] sm:$0xff]
        %v167 = vld [vmem:[%s142 + $0xb0] sm:$0xff]
        %v168 = vld [vmem:[%s142 + $0xb8] sm:$0xff]
        %v169 = vld [vmem:[%s142 + $0xc0] sm:$0xff]
        %v170 = vld [vmem:[%s142 + $0xc8] sm:$0xff]
        %v171 = vld [vmem:[%s142 + $0xd0] sm:$0xff]
        %v172 = vld [vmem:[%s142 + $0xd8] sm:$0xff]
        %v173 = vld [vmem:[%s142 + $0xe0] sm:$0xff]
        %v174 = vld [vmem:[%s142 + $0xe8] sm:$0xff]
        %v175 = vld [vmem:[%s142 + $0xf0] sm:$0xff]
        %v176 = vld [vmem:[%s142 + $0xf8] sm:$0xff]
        %v177 = vld [vmem:[%s1] sm:$0xff]
        %v178 = vld [vmem:[%s1 + $0x8] sm:$0xff]
        %v179 = vld [vmem:[%s1 + $0x10] sm:$0xff]
        %v180 = vld [vmem:[%s1 + $0x18] sm:$0xff]
        %v181 = vld [vmem:[%s1 + $0x20] sm:$0xff]
        %v182 = vld [vmem:[%s1 + $0x28] sm:$0xff]
        %v183 = vld [vmem:[%s1 + $0x30] sm:$0xff]
        %v184 = vld [vmem:[%s1 + $0x38] sm:$0xff]
        %vm185 = vcmask 523264
        %v187 = vsel %vm185, %v145, 0
        %v190 = vsel %vm185, %v146, 0
        %v193 = vsel %vm185, %v147, 0
        %v196 = vsel %vm185, %v148, 0
        %v199 = vsel %vm185, %v149, 0
        %v202 = vsel %vm185, %v150, 0
        %v205 = vsel %vm185, %v151, 0
        %v208 = vsel %vm185, %v152, 0
        %v211 = vsel %vm185, %v153, 0
        %v214 = vsel %vm185, %v154, 0
        %v217 = vsel %vm185, %v155, 0
        %v220 = vsel %vm185, %v156, 0
        %v223 = vsel %vm185, %v157, 0
        %v226 = vsel %vm185, %v158, 0
        %v229 = vsel %vm185, %v159, 0
        %v232 = vsel %vm185, %v160, 0
        %v235 = vsel %vm185, %v161, 0
        %v238 = vsel %vm185, %v162, 0
        %v241 = vsel %vm185, %v163, 0
        %v244 = vsel %vm185, %v164, 0
        %v247 = vsel %vm185, %v165, 0
        %v250 = vsel %vm185, %v166, 0
        %v253 = vsel %vm185, %v167, 0
        %v256 = vsel %vm185, %v168, 0
        %v259 = vsel %vm185, %v169, 0
        %v262 = vsel %vm185, %v170, 0
        %v265 = vsel %vm185, %v171, 0
        %v268 = vsel %vm185, %v172, 0
        %v271 = vsel %vm185, %v173, 0
        %v274 = vsel %vm185, %v174, 0
        %v277 = vsel %vm185, %v175, 0
        %v280 = vsel %vm185, %v176, 0
        %282 = vmatprep.subr.mxu0 0.0
        %283 = vmatpush1.msra.mxu0 %v177
        %284 = vmatprep.subr.mxu0 0.0
        %285 = vmatpush1.msra.mxu0 %v178
        %286 = vmatprep.subr.mxu0 0.0
        %287 = vmatpush1.msra.mxu0 %v179
        %288 = vmatprep.subr.mxu0 0.0
        %289 = vmatpush1.msra.mxu0 %v180
        %290 = vmatprep.subr.mxu0 0.0
        %291 = vmatpush1.msra.mxu0 %v181
        %292 = vmatprep.subr.mxu0 0.0
        %293 = vmatpush1.msra.mxu0 %v182
        %294 = vmatprep.subr.mxu0 0.0
        %295 = vmatpush1.msra.mxu0 %v183
        %296 = vmatprep.subr.mxu0 0.0
        %297 = vmatpush1.msra.mxu0 %v184
        %298 = vmatprep.subr.mxu0 0.0
        %299 = vmatpush1.msra.mxu0 0.0
        %300 = vmatprep.subr.mxu0 0.0
        %301 = vmatpush1.msra.mxu0 0.0
        %302 = vmatprep.subr.mxu0 0.0
        %303 = vmatpush1.msra.mxu0 0.0
        %304 = vmatprep.subr.mxu0 0.0
        %305 = vmatpush1.msra.mxu0 0.0
        %306 = vmatprep.subr.mxu0 0.0
        %307 = vmatpush1.msra.mxu0 0.0
        %308 = vmatprep.subr.mxu0 0.0
        %309 = vmatpush1.msra.mxu0 0.0
        %310 = vmatprep.subr.mxu0 0.0
        %311 = vmatpush1.msra.mxu0 0.0
        %312 = vmatprep.subr.mxu0 0.0
        %313 = vmatpush1.msra.mxu0 0.0
        %314 = vmatprep.subr.mxu0 0.0
        %315 = vmatpush1.msra.mxu0 0.0
        %316 = vmatprep.subr.mxu0 0.0
        %317 = vmatpush1.msra.mxu0 0.0
        %318 = vmatprep.subr.mxu0 0.0
        %319 = vmatpush1.msra.mxu0 0.0
        %320 = vmatprep.subr.mxu0 0.0
        %321 = vmatpush1.msra.mxu0 0.0
        %322 = vmatprep.subr.mxu0 0.0
        %323 = vmatpush1.msra.mxu0 0.0
        %324 = vmatprep.subr.mxu0 0.0
        %325 = vmatpush1.msra.mxu0 0.0
        %326 = vmatprep.subr.mxu0 0.0
        %327 = vmatpush1.msra.mxu0 0.0
        %328 = vmatprep.subr.mxu0 0.0
        %329 = vmatpush1.msra.mxu0 0.0
        %330 = vmatprep.subr.mxu0 0.0
        %331 = vmatpush1.msra.mxu0 0.0
        %332 = vmatprep.subr.mxu0 0.0
        %333 = vmatpush1.msra.mxu0 0.0
        %334 = vmatprep.subr.mxu0 0.0
        %335 = vmatpush1.msra.mxu0 0.0
        %336 = vmatprep.subr.mxu0 0.0
        %337 = vmatpush1.msra.mxu0 0.0
        %338 = vmatprep.subr.mxu0 0.0
        %339 = vmatpush1.msra.mxu0 0.0
        %340 = vmatprep.subr.mxu0 0.0
        %341 = vmatpush1.msra.mxu0 0.0
        %342 = vmatprep.subr.mxu0 0.0
        %343 = vmatpush1.msra.mxu0 0.0
        %344 = vmatprep.subr.mxu0 0.0
        %345 = vmatpush1.msra.mxu0 0.0
        %346 = vmatprep.mubr.f32.mxu0 0.0
        %347 = vmatmul.mubr.f32.gmra.mrb[0].mxu0 %v187
        %v348 = vpop.f32.mrb[0].mxu0
        %v349 = vadd.f32 0.0, %v348
        %v350 = vpop.f32.mrb[0].mxu0
        %351 = vmatprep.mubr.f32.mxu0 0.0
        %352 = vmatmul.mubr.f32.gmra.mrb[0].mxu0 %v190
        %v353 = vpop.f32.mrb[0].mxu0
        %v354 = vadd.f32 0.0, %v353
        %v355 = vpop.f32.mrb[0].mxu0
        %356 = vmatprep.mubr.f32.mxu0 0.0
        %357 = vmatmul.mubr.f32.gmra.mrb[0].mxu0 %v193
        %v358 = vpop.f32.mrb[0].mxu0
        %v359 = vadd.f32 0.0, %v358
        %v360 = vpop.f32.mrb[0].mxu0
        %361 = vmatprep.mubr.f32.mxu0 0.0
        %362 = vmatmul.mubr.f32.gmra.mrb[0].mxu0 %v196
        %v363 = vpop.f32.mrb[0].mxu0
        %v364 = vadd.f32 0.0, %v363
        %v365 = vpop.f32.mrb[0].mxu0
        %366 = vmatprep.mubr.f32.mxu0 0.0
        %367 = vmatmul.mubr.f32.gmra.mrb[0].mxu0 %v199
        %v368 = vpop.f32.mrb[0].mxu0
        %v369 = vadd.f32 0.0, %v368
        %v370 = vpop.f32.mrb[0].mxu0
        %371 = vmatprep.mubr.f32.mxu0 0.0
        %372 = vmatmul.mubr.f32.gmra.mrb[0].mxu0 %v202
        %v373 = vpop.f32.mrb[0].mxu0
        %v374 = vadd.f32 0.0, %v373
        %v375 = vpop.f32.mrb[0].mxu0
        %376 = vmatprep.mubr.f32.mxu0 0.0
        %377 = vmatmul.mubr.f32.gmra.mrb[0].mxu0 %v205
        %v378 = vpop.f32.mrb[0].mxu0
        %v379 = vadd.f32 0.0, %v378
        %v380 = vpop.f32.mrb[0].mxu0
        %381 = vmatprep.mubr.f32.mxu0 0.0
        %382 = vmatmul.mubr.f32.gmra.mrb[0].mxu0 %v208
        %v383 = vpop.f32.mrb[0].mxu0
        %v384 = vadd.f32 0.0, %v383
        %v385 = vpop.f32.mrb[0].mxu0
        %386 = vmatprep.mubr.f32.mxu0 0.0
        %387 = vmatmul.mubr.f32.gmra.mrb[0].mxu0 %v211
        %v388 = vpop.f32.mrb[0].mxu0
        %v389 = vadd.f32 0.0, %v388
        %v390 = vpop.f32.mrb[0].mxu0
        %391 = vmatprep.mubr.f32.mxu0 0.0
        %392 = vmatmul.mubr.f32.gmra.mrb[0].mxu0 %v214
        %v393 = vpop.f32.mrb[0].mxu0
        %v394 = vadd.f32 0.0, %v393
        %v395 = vpop.f32.mrb[0].mxu0
        %396 = vmatprep.mubr.f32.mxu0 0.0
        %397 = vmatmul.mubr.f32.gmra.mrb[0].mxu0 %v217
        %v398 = vpop.f32.mrb[0].mxu0
        %v399 = vadd.f32 0.0, %v398
        %v400 = vpop.f32.mrb[0].mxu0
        %401 = vmatprep.mubr.f32.mxu0 0.0
        %402 = vmatmul.mubr.f32.gmra.mrb[0].mxu0 %v220
        %v403 = vpop.f32.mrb[0].mxu0
        %v404 = vadd.f32 0.0, %v403
        %v405 = vpop.f32.mrb[0].mxu0
        %406 = vmatprep.mubr.f32.mxu0 0.0
        %407 = vmatmul.mubr.f32.gmra.mrb[0].mxu0 %v223
        %v408 = vpop.f32.mrb[0].mxu0
        %v409 = vadd.f32 0.0, %v408
        %v410 = vpop.f32.mrb[0].mxu0
        %411 = vmatprep.mubr.f32.mxu0 0.0
        %412 = vmatmul.mubr.f32.gmra.mrb[0].mxu0 %v226
        %v413 = vpop.f32.mrb[0].mxu0
        %v414 = vadd.f32 0.0, %v413
        %v415 = vpop.f32.mrb[0].mxu0
        %416 = vmatprep.mubr.f32.mxu0 0.0
        %417 = vmatmul.mubr.f32.gmra.mrb[0].mxu0 %v229
        %v418 = vpop.f32.mrb[0].mxu0
        %v419 = vadd.f32 0.0, %v418
        %v420 = vpop.f32.mrb[0].mxu0
        %421 = vmatprep.mubr.f32.mxu0 0.0
        %422 = vmatmul.mubr.f32.gmra.mrb[0].mxu0 %v232
        %v423 = vpop.f32.mrb[0].mxu0
        %v424 = vadd.f32 0.0, %v423
        %v425 = vpop.f32.mrb[0].mxu0
        %426 = vmatprep.mubr.f32.mxu0 0.0
        %427 = vmatmul.mubr.f32.gmra.mrb[0].mxu0 %v235
        %v428 = vpop.f32.mrb[0].mxu0
        %v429 = vadd.f32 0.0, %v428
        %v430 = vpop.f32.mrb[0].mxu0
        %431 = vmatprep.mubr.f32.mxu0 0.0
        %432 = vmatmul.mubr.f32.gmra.mrb[0].mxu0 %v238
        %v433 = vpop.f32.mrb[0].mxu0
        %v434 = vadd.f32 0.0, %v433
        %v435 = vpop.f32.mrb[0].mxu0
        %436 = vmatprep.mubr.f32.mxu0 0.0
        %437 = vmatmul.mubr.f32.gmra.mrb[0].mxu0 %v241
        %v438 = vpop.f32.mrb[0].mxu0
        %v439 = vadd.f32 0.0, %v438
        %v440 = vpop.f32.mrb[0].mxu0
        %441 = vmatprep.mubr.f32.mxu0 0.0
        %442 = vmatmul.mubr.f32.gmra.mrb[0].mxu0 %v244
        %v443 = vpop.f32.mrb[0].mxu0
        %v444 = vadd.f32 0.0, %v443
        %v445 = vpop.f32.mrb[0].mxu0
        %446 = vmatprep.mubr.f32.mxu0 0.0
        %447 = vmatmul.mubr.f32.gmra.mrb[0].mxu0 %v247
        %v448 = vpop.f32.mrb[0].mxu0
        %v449 = vadd.f32 0.0, %v448
        %v450 = vpop.f32.mrb[0].mxu0
        %451 = vmatprep.mubr.f32.mxu0 0.0
        %452 = vmatmul.mubr.f32.gmra.mrb[0].mxu0 %v250
        %v453 = vpop.f32.mrb[0].mxu0
        %v454 = vadd.f32 0.0, %v453
        %v455 = vpop.f32.mrb[0].mxu0
        %456 = vmatprep.mubr.f32.mxu0 0.0
        %457 = vmatmul.mubr.f32.gmra.mrb[0].mxu0 %v253
        %v458 = vpop.f32.mrb[0].mxu0
        %v459 = vadd.f32 0.0, %v458
        %v460 = vpop.f32.mrb[0].mxu0
        %461 = vmatprep.mubr.f32.mxu0 0.0
        %462 = vmatmul.mubr.f32.gmra.mrb[0].mxu0 %v256
        %v463 = vpop.f32.mrb[0].mxu0
        %v464 = vadd.f32 0.0, %v463
        %v465 = vpop.f32.mrb[0].mxu0
        %466 = vmatprep.mubr.f32.mxu0 0.0
        %467 = vmatmul.mubr.f32.gmra.mrb[0].mxu0 %v259
        %v468 = vpop.f32.mrb[0].mxu0
        %v469 = vadd.f32 0.0, %v468
        %v470 = vpop.f32.mrb[0].mxu0
        %471 = vmatprep.mubr.f32.mxu0 0.0
        %472 = vmatmul.mubr.f32.gmra.mrb[0].mxu0 %v262
        %v473 = vpop.f32.mrb[0].mxu0
        %v474 = vadd.f32 0.0, %v473
        %v475 = vpop.f32.mrb[0].mxu0
        %476 = vmatprep.mubr.f32.mxu0 0.0
        %477 = vmatmul.mubr.f32.gmra.mrb[0].mxu0 %v265
        %v478 = vpop.f32.mrb[0].mxu0
        %v479 = vadd.f32 0.0, %v478
        %v480 = vpop.f32.mrb[0].mxu0
        %481 = vmatprep.mubr.f32.mxu0 0.0
        %482 = vmatmul.mubr.f32.gmra.mrb[0].mxu0 %v268
        %v483 = vpop.f32.mrb[0].mxu0
        %v484 = vadd.f32 0.0, %v483
        %v485 = vpop.f32.mrb[0].mxu0
        %486 = vmatprep.mubr.f32.mxu0 0.0
        %487 = vmatmul.mubr.f32.gmra.mrb[0].mxu0 %v271
        %v488 = vpop.f32.mrb[0].mxu0
        %v489 = vadd.f32 0.0, %v488
        %v490 = vpop.f32.mrb[0].mxu0
        %491 = vmatprep.mubr.f32.mxu0 0.0
        %492 = vmatmul.mubr.f32.gmra.mrb[0].mxu0 %v274
        %v493 = vpop.f32.mrb[0].mxu0
        %v494 = vadd.f32 0.0, %v493
        %v495 = vpop.f32.mrb[0].mxu0
        %496 = vmatprep.mubr.f32.mxu0 0.0
        %497 = vmatmul.mubr.f32.gmra.mrb[0].mxu0 %v277
        %v498 = vpop.f32.mrb[0].mxu0
        %v499 = vadd.f32 0.0, %v498
        %v500 = vpop.f32.mrb[0].mxu0
        %501 = vmatprep.mubr.f32.mxu0 0.0
        %502 = vmatmul.mubr.f32.gmra.mrb[0].mxu0 %v280
        %v503 = vpop.f32.mrb[0].mxu0
        %v504 = vadd.f32 0.0, %v503
        %v505 = vpop.f32.mrb[0].mxu0
        %506 = vdwg.mxu0
        %v507 = vpack.c.bf16 %v354, %v349
        %v508 = vpack.c.bf16 %v364, %v359
        %v509 = vpack.c.bf16 %v374, %v369
        %v510 = vpack.c.bf16 %v384, %v379
        %v511 = vpack.c.bf16 %v394, %v389
        %v512 = vpack.c.bf16 %v404, %v399
        %v513 = vpack.c.bf16 %v414, %v409
        %v514 = vpack.c.bf16 %v424, %v419
        %v515 = vpack.c.bf16 %v434, %v429
        %v516 = vpack.c.bf16 %v444, %v439
        %v517 = vpack.c.bf16 %v454, %v449
        %v518 = vpack.c.bf16 %v464, %v459
        %v519 = vpack.c.bf16 %v474, %v469
        %v520 = vpack.c.bf16 %v484, %v479
        %v521 = vpack.c.bf16 %v494, %v489
        %v522 = vpack.c.bf16 %v504, %v499
        %v539 = vunpack.c.l.b16 %v507
        %v540 = vunpack.c.h.b16 %v507
        %v541 = vunpack.c.l.b16 %v508
        %v542 = vunpack.c.h.b16 %v508
        %v543 = vunpack.c.l.b16 %v509
        %v544 = vunpack.c.h.b16 %v509
        %v545 = vunpack.c.l.b16 %v510
        %v546 = vunpack.c.h.b16 %v510
        %v547 = vunpack.c.l.b16 %v511
        %v548 = vunpack.c.h.b16 %v511
        %v549 = vunpack.c.l.b16 %v512
        %v550 = vunpack.c.h.b16 %v512
        %v551 = vunpack.c.l.b16 %v513
        %v552 = vunpack.c.h.b16 %v513
        %v553 = vunpack.c.l.b16 %v514
        %v554 = vunpack.c.h.b16 %v514
        %v555 = vunpack.c.l.b16 %v515
        %v556 = vunpack.c.h.b16 %v515
        %v557 = vunpack.c.l.b16 %v516
        %v558 = vunpack.c.h.b16 %v516
        %v559 = vunpack.c.l.b16 %v517
        %v560 = vunpack.c.h.b16 %v517
        %v561 = vunpack.c.l.b16 %v518
        %v562 = vunpack.c.h.b16 %v518
        %v563 = vunpack.c.l.b16 %v519
        %v564 = vunpack.c.h.b16 %v519
        %v565 = vunpack.c.l.b16 %v520
        %v566 = vunpack.c.h.b16 %v520
        %v567 = vunpack.c.l.b16 %v521
        %v568 = vunpack.c.h.b16 %v521
        %v569 = vunpack.c.l.b16 %v522
        %v570 = vunpack.c.h.b16 %v522
        %v571 = vpack.c.b16 %v539, %v539
        %v572 = vpack.c.b16 %v540, %v540
        %v573 = vpack.c.b16 %v541, %v541
        %v574 = vpack.c.b16 %v542, %v542
        %v575 = vpack.c.b16 %v543, %v543
        %v576 = vpack.c.b16 %v544, %v544
        %v577 = vpack.c.b16 %v545, %v545
        %v578 = vpack.c.b16 %v546, %v546
        %v579 = vpack.c.b16 %v547, %v547
        %v580 = vpack.c.b16 %v548, %v548
        %v581 = vpack.c.b16 %v549, %v549
        %v582 = vpack.c.b16 %v550, %v550
        %v583 = vpack.c.b16 %v551, %v551
        %v584 = vpack.c.b16 %v552, %v552
        %v585 = vpack.c.b16 %v553, %v553
        %v586 = vpack.c.b16 %v554, %v554
        %v587 = vpack.c.b16 %v555, %v555
        %v588 = vpack.c.b16 %v556, %v556
        %v589 = vpack.c.b16 %v557, %v557
        %v590 = vpack.c.b16 %v558, %v558
        %v591 = vpack.c.b16 %v559, %v559
        %v592 = vpack.c.b16 %v560, %v560
        %v593 = vpack.c.b16 %v561, %v561
        %v594 = vpack.c.b16 %v562, %v562
        %v595 = vpack.c.b16 %v563, %v563
        %v596 = vpack.c.b16 %v564, %v564
        %v597 = vpack.c.b16 %v565, %v565
        %v598 = vpack.c.b16 %v566, %v566
        %v599 = vpack.c.b16 %v567, %v567
        %v600 = vpack.c.b16 %v568, %v568
        %v601 = vpack.c.b16 %v569, %v569
        %v602 = vpack.c.b16 %v570, %v570
        %635 = vst [vmem:[%s137] sm:$0xf] %v571
        %636 = vst [vmem:[%s137 + $0x4] sm:$0xf] %v572
        %637 = vst [vmem:[%s137 + $0x8] sm:$0xf] %v573
        %638 = vst [vmem:[%s137 + $0xc] sm:$0xf] %v574
        %639 = vst [vmem:[%s137 + $0x10] sm:$0xf] %v575
        %640 = vst [vmem:[%s137 + $0x14] sm:$0xf] %v576
        %641 = vst [vmem:[%s137 + $0x18] sm:$0xf] %v577
        %642 = vst [vmem:[%s137 + $0x1c] sm:$0xf] %v578
        %643 = vst [vmem:[%s137 + $0x20] sm:$0xf] %v579
        %644 = vst [vmem:[%s137 + $0x24] sm:$0xf] %v580
        %645 = vst [vmem:[%s137 + $0x28] sm:$0xf] %v581
        %646 = vst [vmem:[%s137 + $0x2c] sm:$0xf] %v582
        %647 = vst [vmem:[%s137 + $0x30] sm:$0xf] %v583
        %648 = vst [vmem:[%s137 + $0x34] sm:$0xf] %v584
        %649 = vst [vmem:[%s137 + $0x38] sm:$0xf] %v585
        %650 = vst [vmem:[%s137 + $0x3c] sm:$0xf] %v586
        %651 = vst [vmem:[%s137 + $0x40] sm:$0xf] %v587
        %652 = vst [vmem:[%s137 + $0x44] sm:$0xf] %v588
        %653 = vst [vmem:[%s137 + $0x48] sm:$0xf] %v589
        %654 = vst [vmem:[%s137 + $0x4c] sm:$0xf] %v590
        %655 = vst [vmem:[%s137 + $0x50] sm:$0xf] %v591
        %656 = vst [vmem:[%s137 + $0x54] sm:$0xf] %v592
        %657 = vst [vmem:[%s137 + $0x58] sm:$0xf] %v593
        %658 = vst [vmem:[%s137 + $0x5c] sm:$0xf] %v594
        %659 = vst [vmem:[%s137 + $0x60] sm:$0xf] %v595
        %660 = vst [vmem:[%s137 + $0x64] sm:$0xf] %v596
        %661 = vst [vmem:[%s137 + $0x68] sm:$0xf] %v597
        %662 = vst [vmem:[%s137 + $0x6c] sm:$0xf] %v598
        %663 = vst [vmem:[%s137 + $0x70] sm:$0xf] %v599
        %664 = vst [vmem:[%s137 + $0x74] sm:$0xf] %v600
        %665 = vst [vmem:[%s137 + $0x78] sm:$0xf] %v601
        %666 = vst [vmem:[%s137 + $0x7c] sm:$0xf] %v602
        %s667 = sand.u32 %s71, 1
        %s668 = scalar_lea.sflag [#allocation3], %s667
        %s669 = sand.u32 %s71, 1
        %s670 = smul.addr %s669, 128
        %s671 = scalar_lea.vmem [#allocation2], %s670
        // Predicated region
        $region29: #{tpu_custom_call.1} parent=27 // pred_check
          %p672 = pneg %p81
        $region30: #{tpu_custom_call.1} parent=27 // pred_check_branch
          %674 = sbr.rel (%p672) target = $region32
        $region31: #{tpu_custom_call.1} parent=27 // pred_region
          %s675 = smul.u32 32, %s16
          %s677 = ssub.s32 2048, 2048
          %678 = vsyncadd %s668, %s677
          %s679 = smul.addr %s675, 64
          %s680 = scalar_lea.hbm %s2, %s679
          %s681 = sshll.u32 %s671, 4
          %s682 = int_to_ptr.vmem [resolvable:$true] %s681
          %687 = dma.vmem_to_hbm [thread:$0]  %s682, 2048, %s680, %s668, 64, 64, 4
        $region32: #{tpu_custom_call.1} parent=27 // pred_fallthru
          _
      $region28: #{tpu_custom_call.1} parent=5 // pred_fallthru
        _
      %p688 = scmp.le.s32.totalorder 2, %s11
      // Predicated region
      $region33: #{tpu_custom_call.1} parent=5 // pred_check
        %p689 = pneg %p688
      $region34: #{tpu_custom_call.1} parent=5 // pred_check_branch
        %691 = sbr.rel (%p689) target = $region36
      $region35: #{tpu_custom_call.1} parent=5 // pred_region
        %s692 = ssub.s32 %s11, 2
        // Predicated region
        $region37: #{tpu_custom_call.1} parent=35 // pred_check
          %p693 = pneg %p87
        $region38: #{tpu_custom_call.1} parent=35 // pred_check_branch
          %695 = sbr.rel (%p693) target = $region40
        $region39: #{tpu_custom_call.1} parent=35 // pred_region
          %s696 = sand.u32 %s72, 1
          %s697 = scalar_lea.sflag [#allocation3], %s696
          %s698 = sand.u32 %s72, 1
          %s699 = smul.addr %s698, 128
          %s700 = scalar_lea.vmem [#allocation2], %s699
          %701 = dma.done %s697, 2048
        $region40: #{tpu_custom_call.1} parent=35 // pred_fallthru
          _
      $region36: #{tpu_custom_call.1} parent=5 // pred_fallthru
        _
    $region6: #{tpu_custom_call.1} parent=1 // loop_footer
      %s15 = sadd.s32 1, %s11
    $region7: #{tpu_custom_call.1} parent=1 // loop_footer_branch
      %10 = sbr.rel target = $region3
    $region8: #{tpu_custom_call.1} parent=1 // loop_exit
      _
    %702 = vsyncpa [#allocation3], 1
    %s703 = scalar_lea.sflag [#allocation3], 1
    %704 = vsyncpa %s703, 1

</llo_original>
